<compile_context>
chip_gen: v6e
topology: v6e:2x2x1
jax: 0.10.0
libtpu: 0.0.40
codegen_flags: <defaults>
</compile_context>

<pallas_src>
import math

import jax
import jax.numpy as jnp
from jax.experimental import pallas as pl
from jax.experimental.pallas import tpu as pltpu


def _triple(x):
    if isinstance(x, (tuple, list)):
        assert len(x) == 3
        return tuple(int(v) for v in x)
    return (int(x), int(x), int(x))


# ---------------------------------------------------------------------------
# Fast path: non-overlapping windows (stride == kernel_size, padding == 0).
# ---------------------------------------------------------------------------
def _unpool_local_kernel(x_ref, loc_ref, o_ref):
    # x_ref, loc_ref: (B, 1, L_t)  -- lane-dense along the flattened input.
    # o_ref:          (B, k_vol, L_t)
    k_vol = o_ref.shape[1]
    x = x_ref[...]                                       # (B, 1, L_t)
    loc = loc_ref[...]                                   # (B, 1, L_t) int32
    j = jax.lax.broadcasted_iota(jnp.int32, (1, k_vol, 1), 1)
    # One-hot over the k_vol window positions only (O(L_in * k_vol) VPU work);
    # loc == -1 (dropped value) never matches any j >= 0.
    o_ref[...] = jnp.where(loc == j, x, jnp.zeros((), x.dtype)).astype(o_ref.dtype)


def _max_unpool3d_fast(x, indices, kD, kH, kW):
    N, C, Di, Hi, Wi = x.shape
    NC = N * C
    L_in = Di * Hi * Wi
    k_vol = kD * kH * kW
    Do, Ho, Wo = Di * kD, Hi * kH, Wi * kW

    idx = indices.astype(jnp.int32).reshape(NC, L_in)

    # Decompose the flat output index into each element's within-window offset
    # (cheap O(L_in) arithmetic, done once in XLA outside the kernel; keeps
    # integer div/mod off the VPU critical path).
    i_lin = jnp.arange(L_in, dtype=jnp.int32)
    d_in = i_lin // (Hi * Wi)
    h_in = (i_lin // Wi) % Hi
    w_in = i_lin % Wi
    idx_d = idx // (Ho * Wo)
    idx_h = (idx // Wo) % Ho
    idx_w = idx % Wo
    od = idx_d - d_in[None, :] * kD
    oh = idx_h - h_in[None, :] * kH
    ow = idx_w - w_in[None, :] * kW
    in_win = ((od >= 0) & (od < kD) & (oh >= 0) & (oh < kH)
              & (ow >= 0) & (ow < kW))
    loc = (od * kH + oh) * kW + ow
    # TODO(synk): PyTorch raises on out-of-window indices; we silently drop.
    loc = jnp.where(in_win, loc, -1).astype(jnp.int32)

    x_f = x.reshape(NC, 1, L_in)
    loc_f = loc.reshape(NC, 1, L_in)

    B = math.gcd(NC, 8)                       # channels per grid step
    L_t = L_in if L_in <= 2048 else 2048      # lane tile (multiple of 128)

    out_flat = pl.pallas_call(
        _unpool_local_kernel,
        out_shape=jax.ShapeDtypeStruct((NC, k_vol, L_in), x.dtype),
        grid=(NC // B, pl.cdiv(L_in, L_t)),
        in_specs=[
            pl.BlockSpec((B, 1, L_t), lambda b, i: (b, 0, i)),
            pl.BlockSpec((B, 1, L_t), lambda b, i: (b, 0, i)),
        ],
        out_specs=pl.BlockSpec((B, k_vol, L_t), lambda b, i: (b, 0, i)),
        compiler_params=pltpu.CompilerParams(
            dimension_semantics=("parallel", "parallel")),
    )(x_f, loc_f)

    # Placement is a pure layout transform (disjoint windows), done by XLA.
    out = out_flat.reshape(N, C, kD, kH, kW, Di, Hi, Wi)
    out = out.transpose(0, 1, 5, 2, 6, 3, 7, 4)          # (N,C,Di,kD,Hi,kH,Wi,kW)
    return out.reshape(N, C, Do, Ho, Wo)


# ---------------------------------------------------------------------------
# General fallback: arbitrary stride / padding / output_size.
# ---------------------------------------------------------------------------
def _max_unpool3d_general(x, indices, Do, Ho, Wo):
    # TODO(synk): duplicate indices (possible with overlapping windows) are
    # summed here, whereas PyTorch keeps one value; out-of-range indices are
    # silently dropped instead of raising.
    N, C, Di, Hi, Wi = x.shape
    NC = N * C
    L_in = Di * Hi * Wi
    L_out = Do * Ho * Wo

    x_f = x.reshape(NC, L_in, 1)
    idx_f = indices.astype(jnp.int32).reshape(NC, L_in, 1)

    # Accumulate in f32 for floating inputs (single up/down cast; avoids
    # repeated bf16 emulation on v5e's VPU).
    acc_dtype = jnp.float32 if jnp.issubdtype(x.dtype, jnp.floating) else x.dtype

    # Bound the (B, L_in, L_out_t) select intermediate in VMEM.
    budget = 6 * 1024 * 1024
    elem = 4
    B = math.gcd(NC, 8)
    while B > 1 and B * L_in * 128 * elem > budget:
        B //= 2
    max_lanes = max(128, budget // (B * L_in * elem))
    if L_out <= max_lanes:
        L_out_t = L_out                       # full axis -> no alignment needed
    else:
        L_out_t = min(2048, (max_lanes // 128) * 128)

    def kernel(x_ref, idx_ref, o_ref):
        # x_ref, idx_ref: (B, L_in, 1) ; o_ref: (B, 1, L_out_t) lane-dense out.
        l_t = o_ref.shape[-1]
        base = pl.program_id(1) * l_t
        x_v = x_ref[...].astype(acc_dtype)               # (B, L_in, 1)
        idx_v = idx_ref[...] - base                      # (B, L_in, 1)
        pos = jax.lax.broadcasted_iota(jnp.int32, (1, 1, l_t), 2)
        vals = jnp.where(idx_v == pos, x_v, jnp.zeros((), acc_dtype))
        o_ref[...] = jnp.sum(vals, axis=1, keepdims=True).astype(o_ref.dtype)

    out = pl.pallas_call(
        kernel,
        out_shape=jax.ShapeDtypeStruct((NC, 1, L_out), x.dtype),
        grid=(NC // B, pl.cdiv(L_out, L_out_t)),
        in_specs=[
            pl.BlockSpec((B, L_in, 1), lambda b, j: (b, 0, 0)),
            pl.BlockSpec((B, L_in, 1), lambda b, j: (b, 0, 0)),
        ],
        out_specs=pl.BlockSpec((B, 1, L_out_t), lambda b, j: (b, 0, j)),
        compiler_params=pltpu.CompilerParams(
            dimension_semantics=("parallel", "parallel")),
    )(x_f, idx_f)

    return out.reshape(N, C, Do, Ho, Wo)


# ---------------------------------------------------------------------------
# Public API
# ---------------------------------------------------------------------------
def max_unpool3d(x, indices, kernel_size, stride=None, padding=0,
                 output_size=None):
    """Equivalent of torch.nn.functional.max_unpool3d (forward only)."""
    kD, kH, kW = _triple(kernel_size)
    sD, sH, sW = _triple(stride if stride is not None else kernel_size)
    pD, pH, pW = _triple(padding)

    N, C, Di, Hi, Wi = x.shape
    dDo = (Di - 1) * sD - 2 * pD + kD
    dHo = (Hi - 1) * sH - 2 * pH + kH
    dWo = (Wi - 1) * sW - 2 * pW + kW
    if output_size is not None:
        Do, Ho, Wo = (int(v) for v in tuple(output_size)[-3:])
    else:
        Do, Ho, Wo = dDo, dHo, dWo

    if Do * Ho * Wo >= 2 ** 31:
        raise ValueError("output volume too large for int32 indices")

    fast = ((sD, sH, sW) == (kD, kH, kW) and (pD, pH, pW) == (0, 0, 0)
            and (Do, Ho, Wo) == (dDo, dHo, dWo))
    if fast:
        return _max_unpool3d_fast(x, indices, kD, kH, kW)
    return _max_unpool3d_general(x, indices, Do, Ho, Wo)


class MaxUnpool3d:
    """Stateless JAX/Pallas counterpart of torch.nn.MaxUnpool3d."""

    def __init__(self, kernel_size, stride=None, padding=0):
        self.kernel_size = _triple(kernel_size)
        self.stride = _triple(stride if stride is not None else kernel_size)
        self.padding = _triple(padding)

    def __call__(self, inp, indices, output_size=None):
        return max_unpool3d(inp, indices, self.kernel_size, self.stride,
                            self.padding, output_size)


if __name__ == "__main__":
    key = jax.random.PRNGKey(0)

    def make_indices(k, N, C, Di, Hi, Wi, kD, kH, kW, sD, sH, sW, Ho, Wo):
        kd, kh, kw = jax.random.split(k, 3)
        od = jax.random.randint(kd, (N, C, Di, Hi, Wi), 0, kD)
        oh = jax.random.randint(kh, (N, C, Di, Hi, Wi), 0, kH)
        ow = jax.random.randint(kw, (N, C, Di, Hi, Wi), 0, kW)
        d_out = jnp.arange(Di).reshape(1, 1, Di, 1, 1) * sD + od
        h_out = jnp.arange(Hi).reshape(1, 1, 1, Hi, 1) * sH + oh
        w_out = jnp.arange(Wi).reshape(1, 1, 1, 1, Wi) * sW + ow
        return (((d_out * Ho) + h_out) * Wo + w_out).astype(jnp.int32)

    def scatter_ref(xv, idxv, Do, Ho, Wo):
        N, C, Di, Hi, Wi = xv.shape
        NC, L_in, L_out = N * C, Di * Hi * Wi, Do * Ho * Wo
        ref = jnp.zeros((NC, L_out), dtype=xv.dtype)
        ref = ref.at[jnp.arange(NC)[:, None],
                     idxv.reshape(NC, L_in)].set(xv.reshape(NC, L_in))
        return ref.reshape(N, C, Do, Ho, Wo)

    # --- Fast path: inverse of MaxPool3d(2, stride=2) on a (2,4,4,4,4) input.
    N, C, Di, Hi, Wi = 2, 4, 4, 4, 4
    k1, k2, key = jax.random.split(key, 3)
    x1 = jax.random.normal(k1, (N, C, Di, Hi, Wi), dtype=jnp.float32)
    Do1, Ho1, Wo1 = Di * 2, Hi * 2, Wi * 2
    idx1 = make_indices(k2, N, C, Di, Hi, Wi, 2, 2, 2, 2, 2, 2, Ho1, Wo1)
    out1 = jax.block_until_ready(MaxUnpool3d(2, 2)(x1, idx1))
    ref1 = scatter_ref(x1, idx1, Do1, Ho1, Wo1)
    assert out1.shape == (N, C, Do1, Ho1, Wo1)
    assert jnp.allclose(out1, ref1, atol=1e-6), "fast-path mismatch"

    # --- General path: kernel=2, stride=3 (non-default config), (2,4,3,3,3).
    Di2 = Hi2 = Wi2 = 3
    k3, k4, key = jax.random.split(key, 3)
    x2 = jax.random.normal(k3, (N, C, Di2, Hi2, Wi2), dtype=jnp.float32)
    Do2 = Ho2 = Wo2 = (Di2 - 1) * 3 + 2
    idx2 = make_indices(k4, N, C, Di2, Hi2, Wi2, 2, 2, 2, 3, 3, 3, Ho2, Wo2)
    out2 = jax.block_until_ready(MaxUnpool3d(2, stride=3)(x2, idx2))
    ref2 = scatter_ref(x2, idx2, Do2, Ho2, Wo2)
    assert out2.shape == (N, C, Do2, Ho2, Wo2)
    assert jnp.allclose(out2, ref2, atol=1e-6), "general-path mismatch"

    print("KERNEL_OK")
</pallas_src>

<mosaic_0001>
module attributes {stable_mosaic.version = 11 : i64} {
  func.func @_unpool_local_kernel(%arg0: i32, %arg1: i32, %arg2: memref<8x1x64xf32, #tpu.memory_space<vmem>>, %arg3: memref<8x1x64xi32, #tpu.memory_space<vmem>>, %arg4: memref<8x8x64xf32, #tpu.memory_space<vmem>>) attributes {dimension_semantics = [#tpu.dimension_semantics<parallel>, #tpu.dimension_semantics<parallel>], iteration_bounds = array<i64: 1, 1>, scalar_prefetch = 0 : i64, scratch_operands = 0 : i64, tpu.core_type = #tpu.core_type<tc>, window_params = [{transform_indices = @transform_0, window_bounds = array<i64: 8, 1, 64>}, {transform_indices = @transform_1, window_bounds = array<i64: 8, 1, 64>}, {transform_indices = @transform_2, window_bounds = array<i64: 8, 8, 64>}]} {
    %c0 = arith.constant 0 : index
    %c0_0 = arith.constant 0 : index
    %c0_1 = arith.constant 0 : index
    %0 = vector.load %arg2[%c0, %c0_0, %c0_1] : memref<8x1x64xf32, #tpu.memory_space<vmem>>, vector<8x1x64xf32>
    %c0_2 = arith.constant 0 : index
    %c0_3 = arith.constant 0 : index
    %c0_4 = arith.constant 0 : index
    %1 = vector.load %arg3[%c0_2, %c0_3, %c0_4] : memref<8x1x64xi32, #tpu.memory_space<vmem>>, vector<8x1x64xi32>
    %2 = tpu.iota {dimensions = array<i32: 1>} : vector<1x8x1xi32>
    %3 = vector.broadcast %1 : vector<8x1x64xi32> to vector<8x8x64xi32>
    %4 = vector.broadcast %2 : vector<1x8x1xi32> to vector<8x8x64xi32>
    %5 = arith.cmpi eq, %3, %4 : vector<8x8x64xi32>
    %cst = arith.constant 0.000000e+00 : f32
    %6 = vector.shape_cast %0 : vector<8x1x64xf32> to vector<8x1x64xf32>
    %7 = vector.broadcast %6 : vector<8x1x64xf32> to vector<8x8x64xf32>
    %8 = vector.broadcast %cst : f32 to vector<8x8x64xf32>
    %9 = arith.select %5, %7, %8 : vector<8x8x64xi1>, vector<8x8x64xf32>
    %c0_5 = arith.constant 0 : index
    %c0_6 = arith.constant 0 : index
    %c0_7 = arith.constant 0 : index
    %10 = vector.load %arg4[%c0_5, %c0_6, %c0_7] : memref<8x8x64xf32, #tpu.memory_space<vmem>>, vector<8x8x64xf32>
    tpu.vector_store %arg4[%c0_5, %c0_6, %c0_7], %9 {strides = array<i32>} : memref<8x8x64xf32, #tpu.memory_space<vmem>>, vector<8x8x64xf32>,
    return
  }
  func.func @transform_0(%arg0: i32, %arg1: i32) -> (i32, i32, i32) {
    %c0_i32 = arith.constant 0 : i32
    %c0_i32_0 = arith.constant 0 : i32
    return %arg0, %c0_i32, %arg1 : i32, i32, i32
  }
  func.func @transform_1(%arg0: i32, %arg1: i32) -> (i32, i32, i32) {
    %c0_i32 = arith.constant 0 : i32
    %c0_i32_0 = arith.constant 0 : i32
    return %arg0, %c0_i32, %arg1 : i32, i32, i32
  }
  func.func @transform_2(%arg0: i32, %arg1: i32) -> (i32, i32, i32) {
    %c0_i32 = arith.constant 0 : i32
    %c0_i32_0 = arith.constant 0 : i32
    return %arg0, %c0_i32, %arg1 : i32, i32, i32
  }
}

</mosaic_0001>

<llo_original>
// kernel: tpu_custom_call.1
$region0: #{tpu_custom_call.1}
  #allocation0 [shape = 'u32[]', space=smem, size = 0x4, offset = 0x4, fixed_abs, tag = 'smem constant byte address 0x4 - core index']
  #allocation1 [shape = 'u32[144,128]{1,0:T(1,128)}', space=vmem, size = 0x12000, scoped, tag = 'internal scratch']
  %s0 = inlined_call_operand.hbm [shape: f32[8,1,64], index: 0, kind: input, shape index: {}]
  %s1 = inlined_call_operand.hbm [shape: s32[8,1,64], index: 1, kind: input, shape index: {}]
  %s2 = inlined_call_operand.hbm [shape: f32[8,8,64], index: 2, kind: output, shape index: {}]
  %s3 = sld [smem:[#allocation0]]
  $region26: #{tpu_custom_call.1} parent=0
    _
  %s5 = ssub.s32 1, %s3
  %s6 = scalar_select 0, %s5, %s3
  $region1: #{tpu_custom_call.1} parent=0
    #allocation2 [shape = 'u8[4096]{0}', space=vmem, size = 0x1000, scoped, tag = 'input window, operand 0, single buffered']
    #allocation3 [shape = 's32[1]{0}', space=sflag, size = 0x4, scoped, tag = 'scoped memory for tpu_custom_call.1']
    #allocation4 [shape = 's32[1]{0}', space=sflag, size = 0x4, scoped, tag = 'scoped memory for tpu_custom_call.1']
    #allocation5 [shape = 'u8[4096]{0}', space=vmem, size = 0x1000, scoped, tag = 'input window, operand 1, single buffered']
    #allocation6 [shape = 's32[1]{0}', space=sflag, size = 0x4, scoped, tag = 'scoped memory for tpu_custom_call.1']
    #allocation7 [shape = 'u8[32768]{0}', space=vmem, size = 0x8000, scoped, tag = 'output window, operand 0, single buffered']
    %7 = vsyncpa [#allocation3], 0
    %8 = vsyncpa [#allocation6], 0
    %9 = vsyncpa [#allocation4], 0
    // Predicated region
    $region2: #{tpu_custom_call.1} parent=1 // pred_check
      _
    $region3: #{tpu_custom_call.1} parent=1 // pred_check_branch
      %11 = sbr.rel (0) target = $region5
    $region4: #{tpu_custom_call.1} parent=1 // pred_region
      %s13 = ssub.s32 128, 128
      %14 = vsyncadd [#allocation3], %s13
      %s15 = sshll.u32 [#allocation2], 4
      %s16 = int_to_ptr.vmem [resolvable:$true] %s15
      %21 = dma.hbm_to_vmem [thread:$0]  %s0, 128, %s16, [#allocation3], 16, 16, 1
    $region5: #{tpu_custom_call.1} parent=1 // pred_fallthru
      _
    // Predicated region
    $region6: #{tpu_custom_call.1} parent=1 // pred_check
      _
    $region7: #{tpu_custom_call.1} parent=1 // pred_check_branch
      %23 = sbr.rel (0) target = $region9
    $region8: #{tpu_custom_call.1} parent=1 // pred_region
      %s25 = ssub.s32 128, 128
      %26 = vsyncadd [#allocation6], %s25
      %s27 = sshll.u32 [#allocation5], 4
      %s28 = int_to_ptr.vmem [resolvable:$true] %s27
      %33 = dma.hbm_to_vmem [thread:$0]  %s1, 128, %s28, [#allocation6], 16, 16, 1
    $region9: #{tpu_custom_call.1} parent=1 // pred_fallthru
      _
    // Predicated region
    $region10: #{tpu_custom_call.1} parent=1 // pred_check
      _
    $region11: #{tpu_custom_call.1} parent=1 // pred_check_branch
      %35 = sbr.rel (0) target = $region13
    $region12: #{tpu_custom_call.1} parent=1 // pred_region
      %36 = dma.done [#allocation3], 128
    $region13: #{tpu_custom_call.1} parent=1 // pred_fallthru
      _
    // Predicated region
    $region14: #{tpu_custom_call.1} parent=1 // pred_check
      _
    $region15: #{tpu_custom_call.1} parent=1 // pred_check_branch
      %38 = sbr.rel (0) target = $region17
    $region16: #{tpu_custom_call.1} parent=1 // pred_region
      %39 = dma.done [#allocation6], 128
    $region17: #{tpu_custom_call.1} parent=1 // pred_fallthru
      _
    %v40 = vld [vmem:[#allocation2] sm:$0x1]
    %v41 = vld [vmem:[#allocation2 + $0x1] sm:$0x1]
    %v42 = vld [vmem:[#allocation2 + $0x2] sm:$0x1]
    %v43 = vld [vmem:[#allocation2 + $0x3] sm:$0x1]
    %v44 = vld [vmem:[#allocation2 + $0x4] sm:$0x1]
    %v45 = vld [vmem:[#allocation2 + $0x5] sm:$0x1]
    %v46 = vld [vmem:[#allocation2 + $0x6] sm:$0x1]
    %v47 = vld [vmem:[#allocation2 + $0x7] sm:$0x1]
    %v48 = vld [vmem:[#allocation5] sm:$0x1]
    %v49 = vld [vmem:[#allocation5 + $0x1] sm:$0x1]
    %v50 = vld [vmem:[#allocation5 + $0x2] sm:$0x1]
    %v51 = vld [vmem:[#allocation5 + $0x3] sm:$0x1]
    %v52 = vld [vmem:[#allocation5 + $0x4] sm:$0x1]
    %v53 = vld [vmem:[#allocation5 + $0x5] sm:$0x1]
    %v54 = vld [vmem:[#allocation5 + $0x6] sm:$0x1]
    %v55 = vld [vmem:[#allocation5 + $0x7] sm:$0x1]
    %v56 = vlaneseq
    %v57 = vshrl.u32 %v56, 7
    %v58 = vlaneseq
    %v59 = vshrl.u32 %v58, 7
    %v60 = vsub.s32 0, %v59
    %v61 = vrot.slane %v48, %v60
    %v62 = vlaneseq
    %v63 = vshrl.u32 %v62, 7
    %v64 = vsub.s32 0, %v63
    %v65 = vrot.slane %v49, %v64
    %v66 = vlaneseq
    %v67 = vshrl.u32 %v66, 7
    %v68 = vsub.s32 0, %v67
    %v69 = vrot.slane %v50, %v68
    %v70 = vlaneseq
    %v71 = vshrl.u32 %v70, 7
    %v72 = vsub.s32 0, %v71
    %v73 = vrot.slane %v51, %v72
    %v74 = vlaneseq
    %v75 = vshrl.u32 %v74, 7
    %v76 = vsub.s32 0, %v75
    %v77 = vrot.slane %v52, %v76
    %v78 = vlaneseq
    %v79 = vshrl.u32 %v78, 7
    %v80 = vsub.s32 0, %v79
    %v81 = vrot.slane %v53, %v80
    %v82 = vlaneseq
    %v83 = vshrl.u32 %v82, 7
    %v84 = vsub.s32 0, %v83
    %v85 = vrot.slane %v54, %v84
    %v86 = vlaneseq
    %v87 = vshrl.u32 %v86, 7
    %v88 = vsub.s32 0, %v87
    %v89 = vrot.slane %v55, %v88
    %vm90 = vcmp.eq.s32.totalorder %v61, %v57
    %vm91 = vcmp.eq.s32.totalorder %v65, %v57
    %vm92 = vcmp.eq.s32.totalorder %v69, %v57
    %vm93 = vcmp.eq.s32.totalorder %v73, %v57
    %vm94 = vcmp.eq.s32.totalorder %v77, %v57
    %vm95 = vcmp.eq.s32.totalorder %v81, %v57
    %vm96 = vcmp.eq.s32.totalorder %v85, %v57
    %vm97 = vcmp.eq.s32.totalorder %v89, %v57
    %v106 = vlaneseq
    %v107 = vshrl.u32 %v106, 7
    %v108 = vsub.s32 0, %v107
    %v109 = vrot.slane %v40, %v108
    %v110 = vlaneseq
    %v111 = vshrl.u32 %v110, 7
    %v112 = vsub.s32 0, %v111
    %v113 = vrot.slane %v41, %v112
    %v114 = vlaneseq
    %v115 = vshrl.u32 %v114, 7
    %v116 = vsub.s32 0, %v115
    %v117 = vrot.slane %v42, %v116
    %v118 = vlaneseq
    %v119 = vshrl.u32 %v118, 7
    %v120 = vsub.s32 0, %v119
    %v121 = vrot.slane %v43, %v120
    %v122 = vlaneseq
    %v123 = vshrl.u32 %v122, 7
    %v124 = vsub.s32 0, %v123
    %v125 = vrot.slane %v44, %v124
    %v126 = vlaneseq
    %v127 = vshrl.u32 %v126, 7
    %v128 = vsub.s32 0, %v127
    %v129 = vrot.slane %v45, %v128
    %v130 = vlaneseq
    %v131 = vshrl.u32 %v130, 7
    %v132 = vsub.s32 0, %v131
    %v133 = vrot.slane %v46, %v132
    %v134 = vlaneseq
    %v135 = vshrl.u32 %v134, 7
    %v136 = vsub.s32 0, %v135
    %v137 = vrot.slane %v47, %v136
    %v146 = vsel %vm90, %v109, 0.0
    %v147 = vsel %vm91, %v113, 0.0
    %v148 = vsel %vm92, %v117, 0.0
    %v149 = vsel %vm93, %v121, 0.0
    %v150 = vsel %vm94, %v125, 0.0
    %v151 = vsel %vm95, %v129, 0.0
    %v152 = vsel %vm96, %v133, 0.0
    %v153 = vsel %vm97, %v137, 0.0
    %vm154 = vcmask 523264
    %155 = vst.msk [vmem:[#allocation7] sm:$0xff] %vm154, %v146
    %156 = vst.msk [vmem:[#allocation7 + $0x8] sm:$0xff] %vm154, %v147
    %157 = vst.msk [vmem:[#allocation7 + $0x10] sm:$0xff] %vm154, %v148
    %158 = vst.msk [vmem:[#allocation7 + $0x18] sm:$0xff] %vm154, %v149
    %159 = vst.msk [vmem:[#allocation7 + $0x20] sm:$0xff] %vm154, %v150
    %160 = vst.msk [vmem:[#allocation7 + $0x28] sm:$0xff] %vm154, %v151
    %161 = vst.msk [vmem:[#allocation7 + $0x30] sm:$0xff] %vm154, %v152
    %162 = vst.msk [vmem:[#allocation7 + $0x38] sm:$0xff] %vm154, %v153
    // Predicated region
    $region18: #{tpu_custom_call.1} parent=1 // pred_check
      _
    $region19: #{tpu_custom_call.1} parent=1 // pred_check_branch
      %164 = sbr.rel (0) target = $region21
    $region20: #{tpu_custom_call.1} parent=1 // pred_region
      %s166 = ssub.s32 1024, 1024
      %167 = vsyncadd [#allocation4], %s166
      %s168 = sshll.u32 [#allocation7], 4
      %s169 = int_to_ptr.vmem [resolvable:$true] %s168
      %174 = dma.vmem_to_hbm [thread:$0]  %s169, 1024, %s2, [#allocation4], 128, 128, 8
    $region21: #{tpu_custom_call.1} parent=1 // pred_fallthru
      _
    // Predicated region
    $region22: #{tpu_custom_call.1} parent=1 // pred_check
      _
    $region23: #{tpu_custom_call.1} parent=1 // pred_check_branch
      %176 = sbr.rel (0) target = $region25
    $region24: #{tpu_custom_call.1} parent=1 // pred_region
      %177 = dma.done [#allocation4], 1024
    $region25: #{tpu_custom_call.1} parent=1 // pred_fallthru
      _
    %178 = vsyncpa [#allocation3], 1
    %179 = vsyncpa [#allocation6], 1
    %180 = vsyncpa [#allocation4], 1

</llo_original>
